<compile_context>
chip_gen: v5e
topology: v5e:2x2
jax: 0.10.0
libtpu: 0.0.40
codegen_flags: <defaults>
</compile_context>

<pallas_src>
import functools

import jax
import jax.numpy as jnp
from jax.experimental import pallas as pl
from jax.experimental.pallas import tpu as pltpu

KERNEL_SIZES = (3, 4, 5)
KMAX = max(KERNEL_SIZES)
VMEM_BUDGET_BYTES = 40 << 20      # leaves headroom inside v7x's 64 MiB/TC physical VMEM
VMEM_LIMIT_BYTES = 48 << 20


def _round_up(x, m):
    return (x + m - 1) // m * m


def cnn_simple_kernel(lp, x_ref, wconv_ref, bconv_ref, lout_ref, wfc_ref, bfc_ref,
                      out_ref):
    """One batch tile of the post-embedding forward pass, fully VMEM-resident.

    x_ref     : (TB, L_pad, E_pad)      bf16  embedded tokens, zero-padded time & E
    wconv_ref : (KMAX*E_pad, N_pad)     bf16  fused im2col conv weight (3 branches on N)
    bconv_ref : (1, N_pad)              f32   fused conv bias
    lout_ref  : (1, N_pad)              int32 per-lane valid conv output length
    wfc_ref   : (N_pad, O_pad)          f32   fc weight (zero-padded)
    bfc_ref   : (1, O_pad)              f32   fc bias
    out_ref   : (TB, O_pad)             f32   sigmoid(logits)
    """
    x = x_ref[...]                                   # (TB, L_pad, E_pad) bf16
    tb = x.shape[0]
    e_pad = x.shape[2]
    n_pad = bconv_ref.shape[-1]

    # Fused im2col slab: KMAX shifted views concatenated on the contraction axis.
    # Each chunk is lane-aligned (E_pad % 128 == 0) and Lp % 8 == 0, so the concat
    # and the (TB*Lp, KMAX*E_pad) reshape are (8,128)-tile aligned.
    slab = jnp.concatenate([x[:, j:j + lp, :] for j in range(KMAX)], axis=-1)
    slab = slab.reshape(tb * lp, KMAX * e_pad)       # (TB*Lp, KMAX*E_pad) bf16

    # Single MXU GEMM for all three conv branches.
    acc = jnp.dot(slab, wconv_ref[...],
                  preferred_element_type=jnp.float32)        # (TB*Lp, N_pad) f32
    acc = acc.reshape(tb, lp, n_pad) + bconv_ref[...]        # bias broadcast (f32)
    acc = jnp.maximum(acc, 0.0)                              # ReLU

    # Mask windows past each branch's valid conv length (and the zero-padded lanes).
    # Masking to 0 is ONLY safe because ReLU guarantees valid values >= 0 and every
    # branch has at least one valid window (L >= KMAX) -- keep the mask post-ReLU.
    pos = jax.lax.broadcasted_iota(jnp.int32, (1, lp, 1), 1)
    acc = jnp.where(pos < lout_ref[...], acc, 0.0)           # (TB, Lp, N_pad)

    pooled = jnp.max(acc, axis=1)                            # (TB, N_pad) f32

    # Dropout is identity at inference (eval mode).
    # TODO(synk): training-mode dropout (pltpu.prng_random_bits mask) not implemented.
    logits = jnp.dot(pooled, wfc_ref[...],
                     preferred_element_type=jnp.float32) + bfc_ref[...]
    out_ref[...] = jax.nn.sigmoid(logits)                    # (TB, O_pad) lane-dense


def _pick_batch_tile(batch_tile, b, l_pad, lp, e_pad, n_pad, o_pad):
    """Round the batch tile to 8 sublanes, split for 2 TensorCores when possible,
    and shrink until the per-tile VMEM working set fits the budget."""
    b8 = _round_up(b, 8)
    tb = min(_round_up(batch_tile, 8), b8)
    if b8 // tb < 2 and tb >= 16:        # give v7x's 2nd TensorCore a grid tile
        tb = _round_up(tb // 2, 8)

    fixed = (KMAX * e_pad * n_pad * 2    # fused conv weight (bf16), VMEM-resident
             + 2 * n_pad * 4             # conv bias + lout lanes
             + n_pad * o_pad * 4         # fc weight (f32)
             + o_pad * 4)                # fc bias

    def need(t):
        return (2 * t * l_pad * e_pad * 2    # double-buffered bf16 input tile
                + t * lp * KMAX * e_pad * 2  # im2col slab (bf16)
                + t * lp * n_pad * 4         # f32 conv accumulator
                + 2 * t * o_pad * 4)         # double-buffered f32 output tile

    while tb > 8 and fixed + need(tb) > VMEM_BUDGET_BYTES:
        tb = max(8, _round_up(tb // 2, 8))
    return tb


def cnn_simple_forward(tokens, params, *, batch_tile=128):
    """tokens: (B, L) int32.  Returns sigmoid outputs (B, output_size) float32.

    batch_tile=128 is safe on every generation; v5e/v6e (128 MiB VMEM) can pass 256
    to amortize per-grid-step overhead."""
    emb_table = params['embedding']
    B, L = tokens.shape
    E = emb_table.shape[1]
    H = params['b_conv3'].shape[-1]
    O = params['w_fc'].shape[-1]
    assert L >= KMAX

    louts = tuple(L - k + 1 for k in KERNEL_SIZES)   # true valid conv output lengths
    Lp = _round_up(max(louts), 8)                    # sublane-aligned pooled length
    L_pad = _round_up(Lp + KMAX - 1, 8)              # every KMAX-tap slice of length Lp fits
    E_pad = _round_up(E, 128)                        # lane-aligned contraction chunks
    N_pad = _round_up(len(KERNEL_SIZES) * H, 128)    # lane-dense conv/pool/FC-K dim
    O_pad = _round_up(O, 128)                        # lane-dense output stores

    TB = _pick_batch_tile(batch_tile, B, L_pad, Lp, E_pad, N_pad, O_pad)
    B_pad = _round_up(B, TB)
    nb = B_pad // TB

    # Embedding gather stays plain-JAX glue; streamed activations go bf16.
    # TODO(synk): in-kernel embedding gather (scalar-prefetched token ids + DMA gather)
    # would halve HBM bytes for the dominant input; not implemented here.
    emb = emb_table[tokens].astype(jnp.bfloat16)     # (B, L, E)
    emb = jnp.pad(emb, ((0, B_pad - B), (0, L_pad - L), (0, E_pad - E)))

    # Fused conv weight: taps on rows (zero-padded to KMAX taps / E_pad lanes),
    # branches side by side on the N dim (zero-padded to N_pad).
    w_fused = jnp.zeros((KMAX * E_pad, N_pad), jnp.float32)
    b_fused = jnp.zeros((1, N_pad), jnp.float32)
    lout_lane = jnp.zeros((1, N_pad), jnp.int32)
    for idx, k in enumerate(KERNEL_SIZES):
        w = params[f'w_conv{k}']                     # (k, E, H)
        for j in range(k):
            w_fused = w_fused.at[j * E_pad:j * E_pad + E,
                                 idx * H:(idx + 1) * H].set(w[j])
        b_fused = b_fused.at[:, idx * H:(idx + 1) * H].set(params[f'b_conv{k}'])
        lout_lane = lout_lane.at[:, idx * H:(idx + 1) * H].set(louts[idx])
    w_fused = w_fused.astype(jnp.bfloat16)

    # FC stays f32 (pooled features are f32; avoids an extra bf16 rounding step).
    wfc_pad = jnp.zeros((N_pad, O_pad), jnp.float32).at[:3 * H, :O].set(params['w_fc'])
    bfc_pad = jnp.zeros((1, O_pad), jnp.float32).at[:, :O].set(params['b_fc'])

    kernel = functools.partial(cnn_simple_kernel, Lp)

    out = pl.pallas_call(
        kernel,
        out_shape=jax.ShapeDtypeStruct((B_pad, O_pad), jnp.float32),
        grid=(nb,),
        in_specs=[
            pl.BlockSpec((TB, L_pad, E_pad), lambda i: (i, 0, 0)),   # streamed per tile
            pl.BlockSpec((KMAX * E_pad, N_pad), lambda i: (0, 0)),   # weights resident
            pl.BlockSpec((1, N_pad), lambda i: (0, 0)),
            pl.BlockSpec((1, N_pad), lambda i: (0, 0)),
            pl.BlockSpec((N_pad, O_pad), lambda i: (0, 0)),
            pl.BlockSpec((1, O_pad), lambda i: (0, 0)),
        ],
        out_specs=pl.BlockSpec((TB, O_pad), lambda i: (i, 0)),
        compiler_params=pltpu.CompilerParams(
            dimension_semantics=("parallel",),      # batch tiles independent
            vmem_limit_bytes=VMEM_LIMIT_BYTES),
    )(emb, w_fused, b_fused, lout_lane, wfc_pad, bfc_pad)
    return out[:B, :O]


def cnn_simple_reference(tokens, params):
    """Pure-JAX f32 reference mirroring the PyTorch forward (eval mode)."""
    emb = params['embedding'][tokens]                # (B, L, E)
    L = emb.shape[1]
    pooled = []
    for k in KERNEL_SIZES:
        w = params[f'w_conv{k}']                     # (k, E, H)
        b = params[f'b_conv{k}']                     # (1, H)
        lout = L - k + 1
        acc = sum(jnp.einsum('ble,eh->blh', emb[:, j:j + lout, :], w[j])
                  for j in range(k)) + b
        pooled.append(jnp.max(jax.nn.relu(acc), axis=1))
    feat = jnp.concatenate(pooled, axis=-1)
    return jax.nn.sigmoid(feat @ params['w_fc'] + params['b_fc'])


def init_params(key, vocab_size, embedding_dim, hidden_size, output_size):
    """Deterministic synthetic parameters matching CNN_Simple.__init__ shapes
    (num_layers=1; the num_layers>1 branch of the reference is shape-inconsistent)."""
    keys = jax.random.split(key, 9)
    params = {}
    # nn.Embedding weight ~ build_embedding_matrix: uniform(-0.1, 0.1)
    params['embedding'] = jax.random.uniform(
        keys[0], (vocab_size, embedding_dim), jnp.float32, -0.1, 0.1)
    # Conv2d(1, H, (k, E)) weights, stored transposed as (k, E, H); biases as (1, H)
    for i, k in enumerate(KERNEL_SIZES):
        s = 1.0 / jnp.sqrt(float(k * embedding_dim))
        params[f'w_conv{k}'] = jax.random.uniform(
            keys[1 + 2 * i], (k, embedding_dim, hidden_size), jnp.float32, -s, s)
        params[f'b_conv{k}'] = jax.random.uniform(
            keys[2 + 2 * i], (1, hidden_size), jnp.float32, -s, s)
    # Linear(3H, O), stored transposed as (3H, O); bias (1, O)
    fan_in = hidden_size * len(KERNEL_SIZES)
    s = 1.0 / jnp.sqrt(float(fan_in))
    params['w_fc'] = jax.random.uniform(keys[7], (fan_in, output_size), jnp.float32, -s, s)
    params['b_fc'] = jax.random.uniform(keys[8], (1, output_size), jnp.float32, -s, s)
    return params


if __name__ == "__main__":
    # Small shapes consistent with the module: batch=2, seq=12 (>= max kernel size 5),
    # vocab=50, embedding_dim=32, hidden=16, output=4, num_layers=1.
    vocab_size, embedding_dim, hidden_size, output_size = 50, 32, 16, 4
    B, L = 2, 12

    key = jax.random.PRNGKey(0)
    k_tok, k_par = jax.random.split(key)
    tokens = jax.random.randint(k_tok, (B, L), 0, vocab_size, dtype=jnp.int32)
    params = init_params(k_par, vocab_size, embedding_dim, hidden_size, output_size)

    out = cnn_simple_forward(tokens, params)
    out = jax.block_until_ready(out)
    assert out.shape == (B, output_size)
    assert bool(jnp.all(jnp.isfinite(out)))

    # bf16-conv-matmul / f32-accumulate kernel vs. f32 reference.
    ref = cnn_simple_reference(tokens, params)
    assert bool(jnp.allclose(out, ref, atol=2e-2, rtol=2e-2))
    print("KERNEL_OK")
</pallas_src>

<mosaic_0001>
module attributes {stable_mosaic.version = 11 : i64} {
  func.func @cnn_simple_kernel(%arg0: i32, %arg1: memref<8x24x128xbf16, #tpu.memory_space<vmem>>, %arg2: memref<640x128xbf16, #tpu.memory_space<vmem>>, %arg3: memref<1x128xf32, #tpu.memory_space<vmem>>, %arg4: memref<1x128xi32, #tpu.memory_space<vmem>>, %arg5: memref<128x128xf32, #tpu.memory_space<vmem>>, %arg6: memref<1x128xf32, #tpu.memory_space<vmem>>, %arg7: memref<8x128xf32, #tpu.memory_space<vmem>>) attributes {dimension_semantics = [#tpu.dimension_semantics<parallel>], iteration_bounds = array<i64: 1>, scalar_prefetch = 0 : i64, scratch_operands = 0 : i64, tpu.core_type = #tpu.core_type<tc>, window_params = [{transform_indices = @transform_0, window_bounds = array<i64: 8, 24, 128>}, {pipeline_mode = #tpu.pipeline_mode<synchronous>, transform_indices = @transform_1, window_bounds = array<i64: 640, 128>}, {pipeline_mode = #tpu.pipeline_mode<synchronous>, transform_indices = @transform_2, window_bounds = array<i64: 1, 128>}, {pipeline_mode = #tpu.pipeline_mode<synchronous>, transform_indices = @transform_3, window_bounds = array<i64: 1, 128>}, {pipeline_mode = #tpu.pipeline_mode<synchronous>, transform_indices = @transform_4, window_bounds = array<i64: 128, 128>}, {pipeline_mode = #tpu.pipeline_mode<synchronous>, transform_indices = @transform_5, window_bounds = array<i64: 1, 128>}, {transform_indices = @transform_6, window_bounds = array<i64: 8, 128>}]} {
    %c0 = arith.constant 0 : index
    %c0_0 = arith.constant 0 : index
    %c0_1 = arith.constant 0 : index
    %0 = vector.load %arg1[%c0, %c0_0, %c0_1] : memref<8x24x128xbf16, #tpu.memory_space<vmem>>, vector<8x24x128xbf16>
    %1 = vector.extract_strided_slice %0 {offsets = [0, 0, 0], sizes = [8, 16, 128], strides = [1, 1, 1]} : vector<8x24x128xbf16> to vector<8x16x128xbf16>
    %2 = vector.extract_strided_slice %0 {offsets = [0, 1, 0], sizes = [8, 16, 128], strides = [1, 1, 1]} : vector<8x24x128xbf16> to vector<8x16x128xbf16>
    %3 = vector.extract_strided_slice %0 {offsets = [0, 2, 0], sizes = [8, 16, 128], strides = [1, 1, 1]} : vector<8x24x128xbf16> to vector<8x16x128xbf16>
    %4 = vector.extract_strided_slice %0 {offsets = [0, 3, 0], sizes = [8, 16, 128], strides = [1, 1, 1]} : vector<8x24x128xbf16> to vector<8x16x128xbf16>
    %5 = vector.extract_strided_slice %0 {offsets = [0, 4, 0], sizes = [8, 16, 128], strides = [1, 1, 1]} : vector<8x24x128xbf16> to vector<8x16x128xbf16>
    %6 = tpu.concatenate %1, %2, %3, %4, %5 in 2 : vector<8x16x128xbf16>, vector<8x16x128xbf16>, vector<8x16x128xbf16>, vector<8x16x128xbf16>, vector<8x16x128xbf16> -> vector<8x16x640xbf16>
    %7 = vector.shape_cast %6 : vector<8x16x640xbf16> to vector<128x640xbf16>
    %c0_2 = arith.constant 0 : index
    %c0_3 = arith.constant 0 : index
    %8 = vector.load %arg2[%c0_2, %c0_3] : memref<640x128xbf16, #tpu.memory_space<vmem>>, vector<640x128xbf16>
    %cst = arith.constant dense<0.000000e+00> : vector<128x128xf32>
    %9 = tpu.matmul %7, %8, %cst {dimension_numbers = #tpu.dot_dimension_numbers<[1], [0], [0], [1], [0, 0, 1, 1], [], []>} : vector<128x640xbf16>, vector<640x128xbf16>, vector<128x128xf32> -> vector<128x128xf32>
    %10 = vector.shape_cast %9 : vector<128x128xf32> to vector<8x16x128xf32>
    %c0_4 = arith.constant 0 : index
    %c0_5 = arith.constant 0 : index
    %11 = vector.load %arg3[%c0_4, %c0_5] : memref<1x128xf32, #tpu.memory_space<vmem>>, vector<1x128xf32>
    %12 = vector.shape_cast %11 : vector<1x128xf32> to vector<1x1x128xf32>
    %13 = vector.broadcast %12 : vector<1x1x128xf32> to vector<8x16x128xf32>
    %14 = arith.addf %10, %13 : vector<8x16x128xf32>
    %cst_6 = arith.constant 0.000000e+00 : f32
    %15 = vector.broadcast %cst_6 : f32 to vector<8x16x128xf32>
    %16 = arith.maximumf %14, %15 : vector<8x16x128xf32>
    %17 = tpu.iota {dimensions = array<i32: 1>} : vector<1x16x1xi32>
    %c0_7 = arith.constant 0 : index
    %c0_8 = arith.constant 0 : index
    %18 = vector.load %arg4[%c0_7, %c0_8] : memref<1x128xi32, #tpu.memory_space<vmem>>, vector<1x128xi32>
    %19 = vector.shape_cast %18 : vector<1x128xi32> to vector<1x1x128xi32>
    %20 = vector.broadcast %17 : vector<1x16x1xi32> to vector<1x16x128xi32>
    %21 = vector.broadcast %19 : vector<1x1x128xi32> to vector<1x16x128xi32>
    %22 = arith.cmpi slt, %20, %21 : vector<1x16x128xi32>
    %cst_9 = arith.constant 0.000000e+00 : f32
    %23 = vector.shape_cast %22 : vector<1x16x128xi1> to vector<1x16x128xi1>
    %24 = vector.broadcast %23 : vector<1x16x128xi1> to vector<8x16x128xi1>
    %25 = vector.broadcast %cst_9 : f32 to vector<8x16x128xf32>
    %26 = arith.select %24, %16, %25 : vector<8x16x128xi1>, vector<8x16x128xf32>
    %cst_10 = arith.constant dense<0xFF800000> : vector<8x128xf32>
    %27 = vector.multi_reduction <maximumf>, %26, %cst_10 [1] : vector<8x16x128xf32> to vector<8x128xf32>
    %c0_11 = arith.constant 0 : index
    %c0_12 = arith.constant 0 : index
    %28 = vector.load %arg5[%c0_11, %c0_12] : memref<128x128xf32, #tpu.memory_space<vmem>>, vector<128x128xf32>
    %cst_13 = arith.constant dense<0.000000e+00> : vector<8x128xf32>
    %29 = tpu.matmul %27, %28, %cst_13 {dimension_numbers = #tpu.dot_dimension_numbers<[1], [0], [0], [1], [0, 0, 1, 1], [], []>} : vector<8x128xf32>, vector<128x128xf32>, vector<8x128xf32> -> vector<8x128xf32>
    %c0_14 = arith.constant 0 : index
    %c0_15 = arith.constant 0 : index
    %30 = vector.load %arg6[%c0_14, %c0_15] : memref<1x128xf32, #tpu.memory_space<vmem>>, vector<1x128xf32>
    %31 = vector.broadcast %30 : vector<1x128xf32> to vector<8x128xf32>
    %32 = arith.addf %29, %31 : vector<8x128xf32>
    %33 = arith.negf %32 : vector<8x128xf32>
    %34 = math.exp %33 : vector<8x128xf32>
    %cst_16 = arith.constant 1.000000e+00 : f32
    %35 = vector.broadcast %cst_16 : f32 to vector<8x128xf32>
    %36 = arith.addf %35, %34 : vector<8x128xf32>
    %37 = arith.divf %35, %36 : vector<8x128xf32>
    %c0_17 = arith.constant 0 : index
    %c0_18 = arith.constant 0 : index
    %38 = vector.load %arg7[%c0_17, %c0_18] : memref<8x128xf32, #tpu.memory_space<vmem>>, vector<8x128xf32>
    tpu.vector_store %arg7[%c0_17, %c0_18], %37 {strides = array<i32>} : memref<8x128xf32, #tpu.memory_space<vmem>>, vector<8x128xf32>,
    return
  }
  func.func @transform_0(%arg0: i32) -> (i32, i32, i32) {
    %c0_i32 = arith.constant 0 : i32
    %c0_i32_0 = arith.constant 0 : i32
    %c0_i32_1 = arith.constant 0 : i32
    return %arg0, %c0_i32, %c0_i32_0 : i32, i32, i32
  }
  func.func @transform_1(%arg0: i32) -> (i32, i32) {
    %c0_i32 = arith.constant 0 : i32
    %c0_i32_0 = arith.constant 0 : i32
    %c0_i32_1 = arith.constant 0 : i32
    return %c0_i32, %c0_i32_0 : i32, i32
  }
  func.func @transform_2(%arg0: i32) -> (i32, i32) {
    %c0_i32 = arith.constant 0 : i32
    %c0_i32_0 = arith.constant 0 : i32
    %c0_i32_1 = arith.constant 0 : i32
    return %c0_i32, %c0_i32_0 : i32, i32
  }
  func.func @transform_3(%arg0: i32) -> (i32, i32) {
    %c0_i32 = arith.constant 0 : i32
    %c0_i32_0 = arith.constant 0 : i32
    %c0_i32_1 = arith.constant 0 : i32
    return %c0_i32, %c0_i32_0 : i32, i32
  }
  func.func @transform_4(%arg0: i32) -> (i32, i32) {
    %c0_i32 = arith.constant 0 : i32
    %c0_i32_0 = arith.constant 0 : i32
    %c0_i32_1 = arith.constant 0 : i32
    return %c0_i32, %c0_i32_0 : i32, i32
  }
  func.func @transform_5(%arg0: i32) -> (i32, i32) {
    %c0_i32 = arith.constant 0 : i32
    %c0_i32_0 = arith.constant 0 : i32
    %c0_i32_1 = arith.constant 0 : i32
    return %c0_i32, %c0_i32_0 : i32, i32
  }
  func.func @transform_6(%arg0: i32) -> (i32, i32) {
    %c0_i32 = arith.constant 0 : i32
    %c0_i32_0 = arith.constant 0 : i32
    return %arg0, %c0_i32 : i32, i32
  }
}

</mosaic_0001>

<llo_original>
// kernel: tpu_custom_call.1
$region0: #{tpu_custom_call.1}
  #allocation0 [shape = 'u32[]', space=smem, size = 0x4, offset = 0x4, fixed_abs, tag = 'smem constant byte address 0x4 - core index']
  #allocation1 [shape = 'u32[72,128]{1,0:T(1,128)}', space=vmem, size = 0x9000, scoped, tag = 'internal scratch']
  %s0 = inlined_call_operand.hbm [shape: bf16[8,24,128], index: 0, kind: input, shape index: {}]
  %s1 = inlined_call_operand.hbm [shape: bf16[640,128], index: 1, kind: input, shape index: {}]
  %s2 = inlined_call_operand.vmem [shape: f32[1,128], index: 2, kind: input, shape index: {}]
  %s3 = inlined_call_operand.vmem [shape: s32[1,128], index: 3, kind: input, shape index: {}]
  %s4 = inlined_call_operand.hbm [shape: f32[128,128], index: 4, kind: input, shape index: {}]
  %s5 = inlined_call_operand.vmem [shape: f32[1,128], index: 5, kind: input, shape index: {}]
  %s6 = inlined_call_operand.hbm [shape: f32[8,128], index: 6, kind: output, shape index: {}]
  %s7 = sld [smem:[#allocation0]]
  $region46: #{tpu_custom_call.1} parent=0
    _
  %s9 = ssub.s32 1, %s7
  %s10 = scalar_select 0, %s9, %s7
  $region1: #{tpu_custom_call.1} parent=0
    #allocation2 [shape = 'u8[49152]{0}', space=vmem, size = 0xc000, scoped, tag = 'input window, operand 0, single buffered']
    #allocation3 [shape = 's32[1]{0}', space=sflag, size = 0x4, scoped, tag = 'scoped memory for tpu_custom_call.1']
    #allocation4 [shape = 's32[1]{0}', space=sflag, size = 0x4, scoped, tag = 'scoped memory for tpu_custom_call.1']
    #allocation5 [shape = 'u8[163840]{0}', space=vmem, size = 0x28000, scoped, tag = 'input window, operand 1, single buffered']
    #allocation6 [shape = 's32[1]{0}', space=sflag, size = 0x4, scoped, tag = 'scoped memory for tpu_custom_call.1']
    #allocation7 [shape = 'u8[65536]{0}', space=vmem, size = 0x10000, scoped, tag = 'input window, operand 4, single buffered']
    #allocation8 [shape = 'u8[4096]{0}', space=vmem, size = 0x1000, scoped, tag = 'output window, operand 0, single buffered']
    %11 = vsyncpa [#allocation3], 0
    %12 = vsyncpa [#allocation6], 0
    %13 = vsyncpa [#allocation4], 0
    // Predicated region
    $region2: #{tpu_custom_call.1} parent=1 // pred_check
      _
    $region3: #{tpu_custom_call.1} parent=1 // pred_check_branch
      %15 = sbr.rel (0) target = $region5
    $region4: #{tpu_custom_call.1} parent=1 // pred_region
      %17 = vsyncadd [#allocation3], 0
      %s18 = sshll.u32 %s0, 4
      %s19 = int_to_ptr.hbm [resolvable:$true] %s18
      %s20 = sshll.u32 [#allocation2], 4
      %s21 = int_to_ptr.vmem [resolvable:$true] %s20
      %26 = dma.hbm_to_vmem [thread:$0]  %s19, 1536, %s21, [#allocation3], 64, 64, 4
    $region5: #{tpu_custom_call.1} parent=1 // pred_fallthru
      _
    // Predicated region
    $region6: #{tpu_custom_call.1} parent=1 // pred_check
      _
    $region7: #{tpu_custom_call.1} parent=1 // pred_check_branch
      %28 = sbr.rel (0) target = $region9
    $region8: #{tpu_custom_call.1} parent=1 // pred_region
      %30 = vsyncadd [#allocation6], 0
      %s31 = sshll.u32 %s1, 4
      %s32 = int_to_ptr.hbm [resolvable:$true] %s31
      %s33 = sshll.u32 [#allocation5], 4
      %s34 = int_to_ptr.vmem [resolvable:$true] %s33
      %39 = dma.hbm_to_vmem [thread:$0]  %s32, 5120, %s34, [#allocation6], 64, 64, 4
    $region9: #{tpu_custom_call.1} parent=1 // pred_fallthru
      _
    // Predicated region
    $region10: #{tpu_custom_call.1} parent=1 // pred_check
      _
    $region11: #{tpu_custom_call.1} parent=1 // pred_check_branch
      %41 = sbr.rel (0) target = $region13
    $region12: #{tpu_custom_call.1} parent=1 // pred_region
      _
    $region13: #{tpu_custom_call.1} parent=1 // pred_fallthru
      _
    // Predicated region
    $region14: #{tpu_custom_call.1} parent=1 // pred_check
      _
    $region15: #{tpu_custom_call.1} parent=1 // pred_check_branch
      %43 = sbr.rel (0) target = $region17
    $region16: #{tpu_custom_call.1} parent=1 // pred_region
      _
    $region17: #{tpu_custom_call.1} parent=1 // pred_fallthru
      _
    // Predicated region
    $region18: #{tpu_custom_call.1} parent=1 // pred_check
      _
    $region19: #{tpu_custom_call.1} parent=1 // pred_check_branch
      %45 = sbr.rel (0) target = $region21
    $region20: #{tpu_custom_call.1} parent=1 // pred_region
      %47 = vsyncadd [#allocation6], 0
      %s48 = sshll.u32 %s4, 4
      %s49 = int_to_ptr.hbm [resolvable:$true] %s48
      %s50 = sshll.u32 [#allocation7], 4
      %s51 = int_to_ptr.vmem [resolvable:$true] %s50
      %56 = dma.hbm_to_vmem [thread:$0]  %s49, 2048, %s51, [#allocation6], 128, 128, 8
    $region21: #{tpu_custom_call.1} parent=1 // pred_fallthru
      _
    // Predicated region
    $region22: #{tpu_custom_call.1} parent=1 // pred_check
      _
    $region23: #{tpu_custom_call.1} parent=1 // pred_check_branch
      %58 = sbr.rel (0) target = $region25
    $region24: #{tpu_custom_call.1} parent=1 // pred_region
      _
    $region25: #{tpu_custom_call.1} parent=1 // pred_fallthru
      _
    // Predicated region
    $region26: #{tpu_custom_call.1} parent=1 // pred_check
      _
    $region27: #{tpu_custom_call.1} parent=1 // pred_check_branch
      %60 = sbr.rel (0) target = $region29
    $region28: #{tpu_custom_call.1} parent=1 // pred_region
      %62 = dma.done [#allocation3], 1536
    $region29: #{tpu_custom_call.1} parent=1 // pred_fallthru
      _
    // Predicated region
    $region30: #{tpu_custom_call.1} parent=1 // pred_check
      _
    $region31: #{tpu_custom_call.1} parent=1 // pred_check_branch
      %64 = sbr.rel (0) target = $region33
    $region32: #{tpu_custom_call.1} parent=1 // pred_region
      %66 = dma.done [#allocation6], 5120
    $region33: #{tpu_custom_call.1} parent=1 // pred_fallthru
      _
    // Predicated region
    $region34: #{tpu_custom_call.1} parent=1 // pred_check
      _
    $region35: #{tpu_custom_call.1} parent=1 // pred_check_branch
      %68 = sbr.rel (0) target = $region37
    $region36: #{tpu_custom_call.1} parent=1 // pred_region
      %70 = dma.done [#allocation6], 2048
    $region37: #{tpu_custom_call.1} parent=1 // pred_fallthru
      _
    %v71 = vld [vmem:[#allocation2] sm:$0xf]
    %v72 = vld [vmem:[#allocation2 + $0x4] sm:$0xf]
    %v73 = vld [vmem:[#allocation2 + $0x8] sm:$0xf]
    %v74 = vld [vmem:[#allocation2 + $0xc] sm:$0xf]
    %v75 = vld [vmem:[#allocation2 + $0x10] sm:$0xf]
    %v76 = vld [vmem:[#allocation2 + $0x14] sm:$0xf]
    %v77 = vld [vmem:[#allocation2 + $0x18] sm:$0xf]
    %v78 = vld [vmem:[#allocation2 + $0x1c] sm:$0xf]
    %v79 = vld [vmem:[#allocation2 + $0x20] sm:$0xf]
    %v80 = vld [vmem:[#allocation2 + $0x24] sm:$0xf]
    %v81 = vld [vmem:[#allocation2 + $0x28] sm:$0xf]
    %v82 = vld [vmem:[#allocation2 + $0x2c] sm:$0xf]
    %v83 = vld [vmem:[#allocation2 + $0x30] sm:$0xf]
    %v84 = vld [vmem:[#allocation2 + $0x34] sm:$0xf]
    %v85 = vld [vmem:[#allocation2 + $0x38] sm:$0xf]
    %v86 = vld [vmem:[#allocation2 + $0x3c] sm:$0xf]
    %v87 = vld [vmem:[#allocation2 + $0x40] sm:$0xf]
    %v88 = vld [vmem:[#allocation2 + $0x44] sm:$0xf]
    %v89 = vld [vmem:[#allocation2 + $0x48] sm:$0xf]
    %v90 = vld [vmem:[#allocation2 + $0x4c] sm:$0xf]
    %v91 = vld [vmem:[#allocation2 + $0x50] sm:$0xf]
    %v92 = vld [vmem:[#allocation2 + $0x54] sm:$0xf]
    %v93 = vld [vmem:[#allocation2 + $0x58] sm:$0xf]
    %v94 = vld [vmem:[#allocation2 + $0x5c] sm:$0xf]
    %v111 = vunpack.c.l.b16 %v71
    %v112 = vunpack.c.l.b16 %v72
    %v113 = vunpack.c.l.b16 %v74
    %v114 = vunpack.c.l.b16 %v75
    %v115 = vunpack.c.l.b16 %v77
    %v116 = vunpack.c.l.b16 %v78
    %v117 = vunpack.c.l.b16 %v80
    %v118 = vunpack.c.l.b16 %v81
    %v119 = vunpack.c.l.b16 %v83
    %v120 = vunpack.c.l.b16 %v84
    %v121 = vunpack.c.l.b16 %v86
    %v122 = vunpack.c.l.b16 %v87
    %v123 = vunpack.c.l.b16 %v89
    %v124 = vunpack.c.l.b16 %v90
    %v125 = vunpack.c.l.b16 %v92
    %v126 = vunpack.c.l.b16 %v93
    %v127 = vpack.c.b16 %v112, %v111
    %v128 = vpack.c.b16 %v114, %v113
    %v129 = vpack.c.b16 %v116, %v115
    %v130 = vpack.c.b16 %v118, %v117
    %v131 = vpack.c.b16 %v120, %v119
    %v132 = vpack.c.b16 %v122, %v121
    %v133 = vpack.c.b16 %v124, %v123
    %v134 = vpack.c.b16 %v126, %v125
    %v151 = vunpack.c.l.b16 %v73
    %v152 = vunpack.c.l.b16 %v76
    %v153 = vunpack.c.l.b16 %v79
    %v154 = vunpack.c.l.b16 %v82
    %v155 = vunpack.c.l.b16 %v85
    %v156 = vunpack.c.l.b16 %v88
    %v157 = vunpack.c.l.b16 %v91
    %v158 = vunpack.c.l.b16 %v94
    %v159 = vpack.c.b16 %v151, %v151
    %v160 = vpack.c.b16 %v152, %v152
    %v161 = vpack.c.b16 %v153, %v153
    %v162 = vpack.c.b16 %v154, %v154
    %v163 = vpack.c.b16 %v155, %v155
    %v164 = vpack.c.b16 %v156, %v156
    %v165 = vpack.c.b16 %v157, %v157
    %v166 = vpack.c.b16 %v158, %v158
    %vm167 = vsmask.f32 7424
    %v169 = vshrl.u32 %v127, 16
    %v171 = vshll.u32 %v127, 16
    %v173 = vrot.slane %v171, 1
    %v174 = vor.u32 %v169, %v173
    %v176 = vshll.u32 %v159, 16
    %v178 = vrot.slane %v176, 1
    %v179 = vsel %vm167, %v174, %v178
    %v181 = vshrl.u32 %v128, 16
    %v183 = vshll.u32 %v128, 16
    %v185 = vrot.slane %v183, 1
    %v186 = vor.u32 %v181, %v185
    %v188 = vshll.u32 %v160, 16
    %v190 = vrot.slane %v188, 1
    %v191 = vsel %vm167, %v186, %v190
    %v193 = vshrl.u32 %v129, 16
    %v195 = vshll.u32 %v129, 16
    %v197 = vrot.slane %v195, 1
    %v198 = vor.u32 %v193, %v197
    %v200 = vshll.u32 %v161, 16
    %v202 = vrot.slane %v200, 1
    %v203 = vsel %vm167, %v198, %v202
    %v205 = vshrl.u32 %v130, 16
    %v207 = vshll.u32 %v130, 16
    %v209 = vrot.slane %v207, 1
    %v210 = vor.u32 %v205, %v209
    %v212 = vshll.u32 %v162, 16
    %v214 = vrot.slane %v212, 1
    %v215 = vsel %vm167, %v210, %v214
    %v217 = vshrl.u32 %v131, 16
    %v219 = vshll.u32 %v131, 16
    %v221 = vrot.slane %v219, 1
    %v222 = vor.u32 %v217, %v221
    %v224 = vshll.u32 %v163, 16
    %v226 = vrot.slane %v224, 1
    %v227 = vsel %vm167, %v222, %v226
    %v229 = vshrl.u32 %v132, 16
    %v231 = vshll.u32 %v132, 16
    %v233 = vrot.slane %v231, 1
    %v234 = vor.u32 %v229, %v233
    %v236 = vshll.u32 %v164, 16
    %v238 = vrot.slane %v236, 1
    %v239 = vsel %vm167, %v234, %v238
    %v241 = vshrl.u32 %v133, 16
    %v243 = vshll.u32 %v133, 16
    %v245 = vrot.slane %v243, 1
    %v246 = vor.u32 %v241, %v245
    %v248 = vshll.u32 %v165, 16
    %v250 = vrot.slane %v248, 1
    %v251 = vsel %vm167, %v246, %v250
    %v253 = vshrl.u32 %v134, 16
    %v255 = vshll.u32 %v134, 16
    %v257 = vrot.slane %v255, 1
    %v258 = vor.u32 %v253, %v257
    %v260 = vshll.u32 %v166, 16
    %v262 = vrot.slane %v260, 1
    %v263 = vsel %vm167, %v258, %v262
    %vm272 = vcmask 1046528
    %v273 = vrot.slane %v127, 1
    %v274 = vrot.slane %v159, 1
    %v275 = vsel %vm272, %v273, %v274
    %v276 = vrot.slane %v128, 1
    %v277 = vrot.slane %v160, 1
    %v278 = vsel %vm272, %v276, %v277
    %v279 = vrot.slane %v129, 1
    %v280 = vrot.slane %v161, 1
    %v281 = vsel %vm272, %v279, %v280
    %v282 = vrot.slane %v130, 1
    %v283 = vrot.slane %v162, 1
    %v284 = vsel %vm272, %v282, %v283
    %v285 = vrot.slane %v131, 1
    %v286 = vrot.slane %v163, 1
    %v287 = vsel %vm272, %v285, %v286
    %v288 = vrot.slane %v132, 1
    %v289 = vrot.slane %v164, 1
    %v290 = vsel %vm272, %v288, %v289
    %v291 = vrot.slane %v133, 1
    %v292 = vrot.slane %v165, 1
    %v293 = vsel %vm272, %v291, %v292
    %v294 = vrot.slane %v134, 1
    %v295 = vrot.slane %v166, 1
    %v296 = vsel %vm272, %v294, %v295
    %vm305 = vsmask.f32 6400
    %v306 = vrot.slane %v169, 1
    %v307 = vrot.slane %v171, 2
    %v308 = vor.u32 %v306, %v307
    %v309 = vshrl.u32 %v159, 16
    %v311 = vrot.slane %v309, 1
    %v312 = vrot.slane %v176, 2
    %v313 = vor.u32 %v311, %v312
    %v314 = vsel %vm305, %v308, %v313
    %v315 = vrot.slane %v181, 1
    %v316 = vrot.slane %v183, 2
    %v317 = vor.u32 %v315, %v316
    %v318 = vshrl.u32 %v160, 16
    %v320 = vrot.slane %v318, 1
    %v321 = vrot.slane %v188, 2
    %v322 = vor.u32 %v320, %v321
    %v323 = vsel %vm305, %v317, %v322
    %v324 = vrot.slane %v193, 1
    %v325 = vrot.slane %v195, 2
    %v326 = vor.u32 %v324, %v325
    %v327 = vshrl.u32 %v161, 16
    %v329 = vrot.slane %v327, 1
    %v330 = vrot.slane %v200, 2
    %v331 = vor.u32 %v329, %v330
    %v332 = vsel %vm305, %v326, %v331
    %v333 = vrot.slane %v205, 1
    %v334 = vrot.slane %v207, 2
    %v335 = vor.u32 %v333, %v334
    %v336 = vshrl.u32 %v162, 16
    %v338 = vrot.slane %v336, 1
    %v339 = vrot.slane %v212, 2
    %v340 = vor.u32 %v338, %v339
    %v341 = vsel %vm305, %v335, %v340
    %v342 = vrot.slane %v217, 1
    %v343 = vrot.slane %v219, 2
    %v344 = vor.u32 %v342, %v343
    %v345 = vshrl.u32 %v163, 16
    %v347 = vrot.slane %v345, 1
    %v348 = vrot.slane %v224, 2
    %v349 = vor.u32 %v347, %v348
    %v350 = vsel %vm305, %v344, %v349
    %v351 = vrot.slane %v229, 1
    %v352 = vrot.slane %v231, 2
    %v353 = vor.u32 %v351, %v352
    %v354 = vshrl.u32 %v164, 16
    %v356 = vrot.slane %v354, 1
    %v357 = vrot.slane %v236, 2
    %v358 = vor.u32 %v356, %v357
    %v359 = vsel %vm305, %v353, %v358
    %v360 = vrot.slane %v241, 1
    %v361 = vrot.slane %v243, 2
    %v362 = vor.u32 %v360, %v361
    %v363 = vshrl.u32 %v165, 16
    %v365 = vrot.slane %v363, 1
    %v366 = vrot.slane %v248, 2
    %v367 = vor.u32 %v365, %v366
    %v368 = vsel %vm305, %v362, %v367
    %v369 = vrot.slane %v253, 1
    %v370 = vrot.slane %v255, 2
    %v371 = vor.u32 %v369, %v370
    %v372 = vshrl.u32 %v166, 16
    %v374 = vrot.slane %v372, 1
    %v375 = vrot.slane %v260, 2
    %v376 = vor.u32 %v374, %v375
    %v377 = vsel %vm305, %v371, %v376
    %vm386 = vcmask 1045504
    %v387 = vrot.slane %v127, 2
    %v388 = vrot.slane %v159, 2
    %v389 = vsel %vm386, %v387, %v388
    %v390 = vrot.slane %v128, 2
    %v391 = vrot.slane %v160, 2
    %v392 = vsel %vm386, %v390, %v391
    %v393 = vrot.slane %v129, 2
    %v394 = vrot.slane %v161, 2
    %v395 = vsel %vm386, %v393, %v394
    %v396 = vrot.slane %v130, 2
    %v397 = vrot.slane %v162, 2
    %v398 = vsel %vm386, %v396, %v397
    %v399 = vrot.slane %v131, 2
    %v400 = vrot.slane %v163, 2
    %v401 = vsel %vm386, %v399, %v400
    %v402 = vrot.slane %v132, 2
    %v403 = vrot.slane %v164, 2
    %v404 = vsel %vm386, %v402, %v403
    %v405 = vrot.slane %v133, 2
    %v406 = vrot.slane %v165, 2
    %v407 = vsel %vm386, %v405, %v406
    %v408 = vrot.slane %v134, 2
    %v409 = vrot.slane %v166, 2
    %v410 = vsel %vm386, %v408, %v409
    %v419 = vld [vmem:[#allocation5] sm:$0xf]
    %v420 = vld [vmem:[#allocation5 + $0x4] sm:$0xf]
    %v421 = vld [vmem:[#allocation5 + $0x8] sm:$0xf]
    %v422 = vld [vmem:[#allocation5 + $0xc] sm:$0xf]
    %v423 = vld [vmem:[#allocation5 + $0x10] sm:$0xf]
    %v424 = vld [vmem:[#allocation5 + $0x14] sm:$0xf]
    %v425 = vld [vmem:[#allocation5 + $0x18] sm:$0xf]
    %v426 = vld [vmem:[#allocation5 + $0x1c] sm:$0xf]
    %v427 = vld [vmem:[#allocation5 + $0x20] sm:$0xf]
    %v428 = vld [vmem:[#allocation5 + $0x24] sm:$0xf]
    %v429 = vld [vmem:[#allocation5 + $0x28] sm:$0xf]
    %v430 = vld [vmem:[#allocation5 + $0x2c] sm:$0xf]
    %v431 = vld [vmem:[#allocation5 + $0x30] sm:$0xf]
    %v432 = vld [vmem:[#allocation5 + $0x34] sm:$0xf]
    %v433 = vld [vmem:[#allocation5 + $0x38] sm:$0xf]
    %v434 = vld [vmem:[#allocation5 + $0x3c] sm:$0xf]
    %v435 = vld [vmem:[#allocation5 + $0x40] sm:$0xf]
    %v436 = vld [vmem:[#allocation5 + $0x44] sm:$0xf]
    %v437 = vld [vmem:[#allocation5 + $0x48] sm:$0xf]
    %v438 = vld [vmem:[#allocation5 + $0x4c] sm:$0xf]
    %v439 = vld [vmem:[#allocation5 + $0x50] sm:$0xf]
    %v440 = vld [vmem:[#allocation5 + $0x54] sm:$0xf]
    %v441 = vld [vmem:[#allocation5 + $0x58] sm:$0xf]
    %v442 = vld [vmem:[#allocation5 + $0x5c] sm:$0xf]
    %v443 = vld [vmem:[#allocation5 + $0x60] sm:$0xf]
    %v444 = vld [vmem:[#allocation5 + $0x64] sm:$0xf]
    %v445 = vld [vmem:[#allocation5 + $0x68] sm:$0xf]
    %v446 = vld [vmem:[#allocation5 + $0x6c] sm:$0xf]
    %v447 = vld [vmem:[#allocation5 + $0x70] sm:$0xf]
    %v448 = vld [vmem:[#allocation5 + $0x74] sm:$0xf]
    %v449 = vld [vmem:[#allocation5 + $0x78] sm:$0xf]
    %v450 = vld [vmem:[#allocation5 + $0x7c] sm:$0xf]
    %v451 = vld [vmem:[#allocation5 + $0x80] sm:$0xf]
    %v452 = vld [vmem:[#allocation5 + $0x84] sm:$0xf]
    %v453 = vld [vmem:[#allocation5 + $0x88] sm:$0xf]
    %v454 = vld [vmem:[#allocation5 + $0x8c] sm:$0xf]
    %v455 = vld [vmem:[#allocation5 + $0x90] sm:$0xf]
    %v456 = vld [vmem:[#allocation5 + $0x94] sm:$0xf]
    %v457 = vld [vmem:[#allocation5 + $0x98] sm:$0xf]
    %v458 = vld [vmem:[#allocation5 + $0x9c] sm:$0xf]
    %v459 = vld [vmem:[#allocation5 + $0xa0] sm:$0xf]
    %v460 = vld [vmem:[#allocation5 + $0xa4] sm:$0xf]
    %v461 = vld [vmem:[#allocation5 + $0xa8] sm:$0xf]
    %v462 = vld [vmem:[#allocation5 + $0xac] sm:$0xf]
    %v463 = vld [vmem:[#allocation5 + $0xb0] sm:$0xf]
    %v464 = vld [vmem:[#allocation5 + $0xb4] sm:$0xf]
    %v465 = vld [vmem:[#allocation5 + $0xb8] sm:$0xf]
    %v466 = vld [vmem:[#allocation5 + $0xbc] sm:$0xf]
    %v467 = vld [vmem:[#allocation5 + $0xc0] sm:$0xf]
    %v468 = vld [vmem:[#allocation5 + $0xc4] sm:$0xf]
    %v469 = vld [vmem:[#allocation5 + $0xc8] sm:$0xf]
    %v470 = vld [vmem:[#allocation5 + $0xcc] sm:$0xf]
    %v471 = vld [vmem:[#allocation5 + $0xd0] sm:$0xf]
    %v472 = vld [vmem:[#allocation5 + $0xd4] sm:$0xf]
    %v473 = vld [vmem:[#allocation5 + $0xd8] sm:$0xf]
    %v474 = vld [vmem:[#allocation5 + $0xdc] sm:$0xf]
    %v475 = vld [vmem:[#allocation5 + $0xe0] sm:$0xf]
    %v476 = vld [vmem:[#allocation5 + $0xe4] sm:$0xf]
    %v477 = vld [vmem:[#allocation5 + $0xe8] sm:$0xf]
    %v478 = vld [vmem:[#allocation5 + $0xec] sm:$0xf]
    %v479 = vld [vmem:[#allocation5 + $0xf0] sm:$0xf]
    %v480 = vld [vmem:[#allocation5 + $0xf4] sm:$0xf]
    %v481 = vld [vmem:[#allocation5 + $0xf8] sm:$0xf]
    %v482 = vld [vmem:[#allocation5 + $0xfc] sm:$0xf]
    %v483 = vld [vmem:[#allocation5 + $0x100] sm:$0xf]
    %v484 = vld [vmem:[#allocation5 + $0x104] sm:$0xf]
    %v485 = vld [vmem:[#allocation5 + $0x108] sm:$0xf]
    %v486 = vld [vmem:[#allocation5 + $0x10c] sm:$0xf]
    %v487 = vld [vmem:[#allocation5 + $0x110] sm:$0xf]
    %v488 = vld [vmem:[#allocation5 + $0x114] sm:$0xf]
    %v489 = vld [vmem:[#allocation5 + $0x118] sm:$0xf]
    %v490 = vld [vmem:[#allocation5 + $0x11c] sm:$0xf]
    %v491 = vld [vmem:[#allocation5 + $0x120] sm:$0xf]
    %v492 = vld [vmem:[#allocation5 + $0x124] sm:$0xf]
    %v493 = vld [vmem:[#allocation5 + $0x128] sm:$0xf]
    %v494 = vld [vmem:[#allocation5 + $0x12c] sm:$0xf]
    %v495 = vld [vmem:[#allocation5 + $0x130] sm:$0xf]
    %v496 = vld [vmem:[#allocation5 + $0x134] sm:$0xf]
    %v497 = vld [vmem:[#allocation5 + $0x138] sm:$0xf]
    %v498 = vld [vmem:[#allocation5 + $0x13c] sm:$0xf]
    %v579 = vunpack.c.l.b16 %v419
    %v580 = vunpack.c.l.b16 %v420
    %v581 = vunpack.c.l.b16 %v421
    %v582 = vunpack.c.l.b16 %v422
    %v583 = vunpack.c.l.b16 %v423
    %v584 = vunpack.c.l.b16 %v424
    %v585 = vunpack.c.l.b16 %v425
    %v586 = vunpack.c.l.b16 %v426
    %v587 = vunpack.c.l.b16 %v427
    %v588 = vunpack.c.l.b16 %v428
    %v589 = vunpack.c.l.b16 %v429
    %v590 = vunpack.c.l.b16 %v430
    %v591 = vunpack.c.l.b16 %v431
    %v592 = vunpack.c.l.b16 %v432
    %v593 = vunpack.c.l.b16 %v433
    %v594 = vunpack.c.l.b16 %v434
    %v595 = vunpack.c.l.b16 %v435
    %v596 = vunpack.c.l.b16 %v436
    %v597 = vunpack.c.l.b16 %v437
    %v598 = vunpack.c.l.b16 %v438
    %v599 = vunpack.c.l.b16 %v439
    %v600 = vunpack.c.l.b16 %v440
    %v601 = vunpack.c.l.b16 %v441
    %v602 = vunpack.c.l.b16 %v442
    %v603 = vunpack.c.l.b16 %v443
    %v604 = vunpack.c.l.b16 %v444
    %v605 = vunpack.c.l.b16 %v445
    %v606 = vunpack.c.l.b16 %v446
    %v607 = vunpack.c.l.b16 %v447
    %v608 = vunpack.c.l.b16 %v448
    %v609 = vunpack.c.l.b16 %v449
    %v610 = vunpack.c.l.b16 %v450
    %v611 = vunpack.c.l.b16 %v451
    %v612 = vunpack.c.l.b16 %v452
    %v613 = vunpack.c.l.b16 %v453
    %v614 = vunpack.c.l.b16 %v454
    %v615 = vunpack.c.l.b16 %v455
    %v616 = vunpack.c.l.b16 %v456
    %v617 = vunpack.c.l.b16 %v457
    %v618 = vunpack.c.l.b16 %v458
    %v619 = vunpack.c.l.b16 %v459
    %v620 = vunpack.c.l.b16 %v460
    %v621 = vunpack.c.l.b16 %v461
    %v622 = vunpack.c.l.b16 %v462
    %v623 = vunpack.c.l.b16 %v463
    %v624 = vunpack.c.l.b16 %v464
    %v625 = vunpack.c.l.b16 %v465
    %v626 = vunpack.c.l.b16 %v466
    %v627 = vunpack.c.l.b16 %v467
    %v628 = vunpack.c.l.b16 %v468
    %v629 = vunpack.c.l.b16 %v469
    %v630 = vunpack.c.l.b16 %v470
    %v631 = vunpack.c.l.b16 %v471
    %v632 = vunpack.c.l.b16 %v472
    %v633 = vunpack.c.l.b16 %v473
    %v634 = vunpack.c.l.b16 %v474
    %v635 = vunpack.c.l.b16 %v475
    %v636 = vunpack.c.l.b16 %v476
    %v637 = vunpack.c.l.b16 %v477
    %v638 = vunpack.c.l.b16 %v478
    %v639 = vunpack.c.l.b16 %v479
    %v640 = vunpack.c.l.b16 %v480
    %v641 = vunpack.c.l.b16 %v481
    %v642 = vunpack.c.l.b16 %v482
    %v643 = vunpack.c.l.b16 %v483
    %v644 = vunpack.c.l.b16 %v484
    %v645 = vunpack.c.l.b16 %v485
    %v646 = vunpack.c.l.b16 %v486
    %v647 = vunpack.c.l.b16 %v487
    %v648 = vunpack.c.l.b16 %v488
    %v649 = vunpack.c.l.b16 %v489
    %v650 = vunpack.c.l.b16 %v490
    %v651 = vunpack.c.l.b16 %v491
    %v652 = vunpack.c.l.b16 %v492
    %v653 = vunpack.c.l.b16 %v493
    %v654 = vunpack.c.l.b16 %v494
    %v655 = vunpack.c.l.b16 %v495
    %v656 = vunpack.c.l.b16 %v496
    %v657 = vunpack.c.l.b16 %v497
    %v658 = vunpack.c.l.b16 %v498
    %v659 = vpack.c.b16 %v580, %v579
    %v660 = vpack.c.b16 %v582, %v581
    %v661 = vpack.c.b16 %v584, %v583
    %v662 = vpack.c.b16 %v586, %v585
    %v663 = vpack.c.b16 %v588, %v587
    %v664 = vpack.c.b16 %v590, %v589
    %v665 = vpack.c.b16 %v592, %v591
    %v666 = vpack.c.b16 %v594, %v593
    %v667 = vpack.c.b16 %v596, %v595
    %v668 = vpack.c.b16 %v598, %v597
    %v669 = vpack.c.b16 %v600, %v599
    %v670 = vpack.c.b16 %v602, %v601
    %v671 = vpack.c.b16 %v604, %v603
    %v672 = vpack.c.b16 %v606, %v605
    %v673 = vpack.c.b16 %v608, %v607
    %v674 = vpack.c.b16 %v610, %v609
    %v675 = vpack.c.b16 %v612, %v611
    %v676 = vpack.c.b16 %v614, %v613
    %v677 = vpack.c.b16 %v616, %v615
    %v678 = vpack.c.b16 %v618, %v617
    %v679 = vpack.c.b16 %v620, %v619
    %v680 = vpack.c.b16 %v622, %v621
    %v681 = vpack.c.b16 %v624, %v623
    %v682 = vpack.c.b16 %v626, %v625
    %v683 = vpack.c.b16 %v628, %v627
    %v684 = vpack.c.b16 %v630, %v629
    %v685 = vpack.c.b16 %v632, %v631
    %v686 = vpack.c.b16 %v634, %v633
    %v687 = vpack.c.b16 %v636, %v635
    %v688 = vpack.c.b16 %v638, %v637
    %v689 = vpack.c.b16 %v640, %v639
    %v690 = vpack.c.b16 %v642, %v641
    %v691 = vpack.c.b16 %v644, %v643
    %v692 = vpack.c.b16 %v646, %v645
    %v693 = vpack.c.b16 %v648, %v647
    %v694 = vpack.c.b16 %v650, %v649
    %v695 = vpack.c.b16 %v652, %v651
    %v696 = vpack.c.b16 %v654, %v653
    %v697 = vpack.c.b16 %v656, %v655
    %v698 = vpack.c.b16 %v658, %v657
    %739 = vmatpush.bf16.msra.mxu0 %v666
    %740 = vmatpush.bf16.msra.mxu0 %v665
    %741 = vmatpush.bf16.msra.mxu0 %v664
    %742 = vmatpush.bf16.msra.mxu0 %v663
    %743 = vmatpush.bf16.msra.mxu0 %v662
    %744 = vmatpush.bf16.msra.mxu0 %v661
    %745 = vmatpush.bf16.msra.mxu0 %v660
    %746 = vmatpush.bf16.msra.mxu0 %v659
    %747 = vmatmul.bf16.gmra.mxu0 %v127
    %v748 = vpop.f32.mrf.mxu0
    %v749 = vadd.f32 0.0, %v748
    %v750 = vpop.f32.mrf.mxu0
    %v751 = vadd.f32 0.0, %v750
    %752 = vmatmul.bf16.gmra.mxu0 %v128
    %v753 = vpop.f32.mrf.mxu0
    %v754 = vadd.f32 0.0, %v753
    %v755 = vpop.f32.mrf.mxu0
    %v756 = vadd.f32 0.0, %v755
    %757 = vmatmul.bf16.gmra.mxu0 %v129
    %v758 = vpop.f32.mrf.mxu0
    %v759 = vadd.f32 0.0, %v758
    %v760 = vpop.f32.mrf.mxu0
    %v761 = vadd.f32 0.0, %v760
    %762 = vmatmul.bf16.gmra.mxu0 %v130
    %v763 = vpop.f32.mrf.mxu0
    %v764 = vadd.f32 0.0, %v763
    %v765 = vpop.f32.mrf.mxu0
    %v766 = vadd.f32 0.0, %v765
    %767 = vmatmul.bf16.gmra.mxu0 %v131
    %v768 = vpop.f32.mrf.mxu0
    %v769 = vadd.f32 0.0, %v768
    %v770 = vpop.f32.mrf.mxu0
    %v771 = vadd.f32 0.0, %v770
    %772 = vmatmul.bf16.gmra.mxu0 %v132
    %v773 = vpop.f32.mrf.mxu0
    %v774 = vadd.f32 0.0, %v773
    %v775 = vpop.f32.mrf.mxu0
    %v776 = vadd.f32 0.0, %v775
    %777 = vmatmul.bf16.gmra.mxu0 %v133
    %v778 = vpop.f32.mrf.mxu0
    %v779 = vadd.f32 0.0, %v778
    %v780 = vpop.f32.mrf.mxu0
    %v781 = vadd.f32 0.0, %v780
    %782 = vmatmul.bf16.gmra.mxu0 %v134
    %v783 = vpop.f32.mrf.mxu0
    %v784 = vadd.f32 0.0, %v783
    %v785 = vpop.f32.mrf.mxu0
    %v786 = vadd.f32 0.0, %v785
    %787 = vdwg.mxu0
    %788 = vmatpush.bf16.msra.mxu0 %v674
    %789 = vmatpush.bf16.msra.mxu0 %v673
    %790 = vmatpush.bf16.msra.mxu0 %v672
    %791 = vmatpush.bf16.msra.mxu0 %v671
    %792 = vmatpush.bf16.msra.mxu0 %v670
    %793 = vmatpush.bf16.msra.mxu0 %v669
    %794 = vmatpush.bf16.msra.mxu0 %v668
    %795 = vmatpush.bf16.msra.mxu0 %v667
    %796 = vmatmul.bf16.gmra.mxu0 %v179
    %v797 = vpop.f32.mrf.mxu0
    %v798 = vadd.f32 %v749, %v797
    %v799 = vpop.f32.mrf.mxu0
    %v800 = vadd.f32 %v751, %v799
    %801 = vmatmul.bf16.gmra.mxu0 %v191
    %v802 = vpop.f32.mrf.mxu0
    %v803 = vadd.f32 %v754, %v802
    %v804 = vpop.f32.mrf.mxu0
    %v805 = vadd.f32 %v756, %v804
    %806 = vmatmul.bf16.gmra.mxu0 %v203
    %v807 = vpop.f32.mrf.mxu0
    %v808 = vadd.f32 %v759, %v807
    %v809 = vpop.f32.mrf.mxu0
    %v810 = vadd.f32 %v761, %v809
    %811 = vmatmul.bf16.gmra.mxu0 %v215
    %v812 = vpop.f32.mrf.mxu0
    %v813 = vadd.f32 %v764, %v812
    %v814 = vpop.f32.mrf.mxu0
    %v815 = vadd.f32 %v766, %v814
    %816 = vmatmul.bf16.gmra.mxu0 %v227
    %v817 = vpop.f32.mrf.mxu0
    %v818 = vadd.f32 %v769, %v817
    %v819 = vpop.f32.mrf.mxu0
    %v820 = vadd.f32 %v771, %v819
    %821 = vmatmul.bf16.gmra.mxu0 %v239
    %v822 = vpop.f32.mrf.mxu0
    %v823 = vadd.f32 %v774, %v822
    %v824 = vpop.f32.mrf.mxu0
    %v825 = vadd.f32 %v776, %v824
    %826 = vmatmul.bf16.gmra.mxu0 %v251
    %v827 = vpop.f32.mrf.mxu0
    %v828 = vadd.f32 %v779, %v827
    %v829 = vpop.f32.mrf.mxu0
    %v830 = vadd.f32 %v781, %v829
    %831 = vmatmul.bf16.gmra.mxu0 %v263
    %v832 = vpop.f32.mrf.mxu0
    %v833 = vadd.f32 %v784, %v832
    %v834 = vpop.f32.mrf.mxu0
    %v835 = vadd.f32 %v786, %v834
    %836 = vdwg.mxu0
    %837 = vmatpush.bf16.msra.mxu0 %v682
    %838 = vmatpush.bf16.msra.mxu0 %v681
    %839 = vmatpush.bf16.msra.mxu0 %v680
    %840 = vmatpush.bf16.msra.mxu0 %v679
    %841 = vmatpush.bf16.msra.mxu0 %v678
    %842 = vmatpush.bf16.msra.mxu0 %v677
    %843 = vmatpush.bf16.msra.mxu0 %v676
    %844 = vmatpush.bf16.msra.mxu0 %v675
    %845 = vmatmul.bf16.gmra.mxu0 %v275
    %v846 = vpop.f32.mrf.mxu0
    %v847 = vadd.f32 %v798, %v846
    %v848 = vpop.f32.mrf.mxu0
    %v849 = vadd.f32 %v800, %v848
    %850 = vmatmul.bf16.gmra.mxu0 %v278
    %v851 = vpop.f32.mrf.mxu0
    %v852 = vadd.f32 %v803, %v851
    %v853 = vpop.f32.mrf.mxu0
    %v854 = vadd.f32 %v805, %v853
    %855 = vmatmul.bf16.gmra.mxu0 %v281
    %v856 = vpop.f32.mrf.mxu0
    %v857 = vadd.f32 %v808, %v856
    %v858 = vpop.f32.mrf.mxu0
    %v859 = vadd.f32 %v810, %v858
    %860 = vmatmul.bf16.gmra.mxu0 %v284
    %v861 = vpop.f32.mrf.mxu0
    %v862 = vadd.f32 %v813, %v861
    %v863 = vpop.f32.mrf.mxu0
    %v864 = vadd.f32 %v815, %v863
    %865 = vmatmul.bf16.gmra.mxu0 %v287
    %v866 = vpop.f32.mrf.mxu0
    %v867 = vadd.f32 %v818, %v866
    %v868 = vpop.f32.mrf.mxu0
    %v869 = vadd.f32 %v820, %v868
    %870 = vmatmul.bf16.gmra.mxu0 %v290
    %v871 = vpop.f32.mrf.mxu0
    %v872 = vadd.f32 %v823, %v871
    %v873 = vpop.f32.mrf.mxu0
    %v874 = vadd.f32 %v825, %v873
    %875 = vmatmul.bf16.gmra.mxu0 %v293
    %v876 = vpop.f32.mrf.mxu0
    %v877 = vadd.f32 %v828, %v876
    %v878 = vpop.f32.mrf.mxu0
    %v879 = vadd.f32 %v830, %v878
    %880 = vmatmul.bf16.gmra.mxu0 %v296
    %v881 = vpop.f32.mrf.mxu0
    %v882 = vadd.f32 %v833, %v881
    %v883 = vpop.f32.mrf.mxu0
    %v884 = vadd.f32 %v835, %v883
    %885 = vdwg.mxu0
    %886 = vmatpush.bf16.msra.mxu0 %v690
    %887 = vmatpush.bf16.msra.mxu0 %v689
    %888 = vmatpush.bf16.msra.mxu0 %v688
    %889 = vmatpush.bf16.msra.mxu0 %v687
    %890 = vmatpush.bf16.msra.mxu0 %v686
    %891 = vmatpush.bf16.msra.mxu0 %v685
    %892 = vmatpush.bf16.msra.mxu0 %v684
    %893 = vmatpush.bf16.msra.mxu0 %v683
    %894 = vmatmul.bf16.gmra.mxu0 %v314
    %v895 = vpop.f32.mrf.mxu0
    %v896 = vadd.f32 %v847, %v895
    %v897 = vpop.f32.mrf.mxu0
    %v898 = vadd.f32 %v849, %v897
    %899 = vmatmul.bf16.gmra.mxu0 %v323
    %v900 = vpop.f32.mrf.mxu0
    %v901 = vadd.f32 %v852, %v900
    %v902 = vpop.f32.mrf.mxu0
    %v903 = vadd.f32 %v854, %v902
    %904 = vmatmul.bf16.gmra.mxu0 %v332
    %v905 = vpop.f32.mrf.mxu0
    %v906 = vadd.f32 %v857, %v905
    %v907 = vpop.f32.mrf.mxu0
    %v908 = vadd.f32 %v859, %v907
    %909 = vmatmul.bf16.gmra.mxu0 %v341
    %v910 = vpop.f32.mrf.mxu0
    %v911 = vadd.f32 %v862, %v910
    %v912 = vpop.f32.mrf.mxu0
    %v913 = vadd.f32 %v864, %v912
    %914 = vmatmul.bf16.gmra.mxu0 %v350
    %v915 = vpop.f32.mrf.mxu0
    %v916 = vadd.f32 %v867, %v915
    %v917 = vpop.f32.mrf.mxu0
    %v918 = vadd.f32 %v869, %v917
    %919 = vmatmul.bf16.gmra.mxu0 %v359
    %v920 = vpop.f32.mrf.mxu0
    %v921 = vadd.f32 %v872, %v920
    %v922 = vpop.f32.mrf.mxu0
    %v923 = vadd.f32 %v874, %v922
    %924 = vmatmul.bf16.gmra.mxu0 %v368
    %v925 = vpop.f32.mrf.mxu0
    %v926 = vadd.f32 %v877, %v925
    %v927 = vpop.f32.mrf.mxu0
    %v928 = vadd.f32 %v879, %v927
    %929 = vmatmul.bf16.gmra.mxu0 %v377
    %v930 = vpop.f32.mrf.mxu0
    %v931 = vadd.f32 %v882, %v930
    %v932 = vpop.f32.mrf.mxu0
    %v933 = vadd.f32 %v884, %v932
    %934 = vdwg.mxu0
    %935 = vmatpush.bf16.msra.mxu0 %v698
    %936 = vmatpush.bf16.msra.mxu0 %v697
    %937 = vmatpush.bf16.msra.mxu0 %v696
    %938 = vmatpush.bf16.msra.mxu0 %v695
    %939 = vmatpush.bf16.msra.mxu0 %v694
    %940 = vmatpush.bf16.msra.mxu0 %v693
    %941 = vmatpush.bf16.msra.mxu0 %v692
    %942 = vmatpush.bf16.msra.mxu0 %v691
    %943 = vmatmul.bf16.gmra.mxu0 %v389
    %v944 = vpop.f32.mrf.mxu0
    %v945 = vadd.f32 %v896, %v944
    %v946 = vpop.f32.mrf.mxu0
    %v947 = vadd.f32 %v898, %v946
    %948 = vmatmul.bf16.gmra.mxu0 %v392
    %v949 = vpop.f32.mrf.mxu0
    %v950 = vadd.f32 %v901, %v949
    %v951 = vpop.f32.mrf.mxu0
    %v952 = vadd.f32 %v903, %v951
    %953 = vmatmul.bf16.gmra.mxu0 %v395
    %v954 = vpop.f32.mrf.mxu0
    %v955 = vadd.f32 %v906, %v954
    %v956 = vpop.f32.mrf.mxu0
    %v957 = vadd.f32 %v908, %v956
    %958 = vmatmul.bf16.gmra.mxu0 %v398
    %v959 = vpop.f32.mrf.mxu0
    %v960 = vadd.f32 %v911, %v959
    %v961 = vpop.f32.mrf.mxu0
    %v962 = vadd.f32 %v913, %v961
    %963 = vmatmul.bf16.gmra.mxu0 %v401
    %v964 = vpop.f32.mrf.mxu0
    %v965 = vadd.f32 %v916, %v964
    %v966 = vpop.f32.mrf.mxu0
    %v967 = vadd.f32 %v918, %v966
    %968 = vmatmul.bf16.gmra.mxu0 %v404
    %v969 = vpop.f32.mrf.mxu0
    %v970 = vadd.f32 %v921, %v969
    %v971 = vpop.f32.mrf.mxu0
    %v972 = vadd.f32 %v923, %v971
    %973 = vmatmul.bf16.gmra.mxu0 %v407
    %v974 = vpop.f32.mrf.mxu0
    %v975 = vadd.f32 %v926, %v974
    %v976 = vpop.f32.mrf.mxu0
    %v977 = vadd.f32 %v928, %v976
    %978 = vmatmul.bf16.gmra.mxu0 %v410
    %v979 = vpop.f32.mrf.mxu0
    %v980 = vadd.f32 %v931, %v979
    %v981 = vpop.f32.mrf.mxu0
    %v982 = vadd.f32 %v933, %v981
    %983 = vdwg.mxu0
    %v984 = vld [vmem:[%s2] sm:$0x1]
    %v986 = vperm.slane %v984, 0
    %v988 = vadd.f32 %v945, %v986
    %v989 = vadd.f32 %v947, %v986
    %v990 = vadd.f32 %v950, %v986
    %v991 = vadd.f32 %v952, %v986
    %v992 = vadd.f32 %v955, %v986
    %v993 = vadd.f32 %v957, %v986
    %v994 = vadd.f32 %v960, %v986
    %v995 = vadd.f32 %v962, %v986
    %v996 = vadd.f32 %v965, %v986
    %v997 = vadd.f32 %v967, %v986
    %v998 = vadd.f32 %v970, %v986
    %v999 = vadd.f32 %v972, %v986
    %v1000 = vadd.f32 %v975, %v986
    %v1001 = vadd.f32 %v977, %v986
    %v1002 = vadd.f32 %v980, %v986
    %v1003 = vadd.f32 %v982, %v986
    %v1004 = vmax.f32 %v988, 0.0
    %v1005 = vmax.f32 %v989, 0.0
    %v1006 = vmax.f32 %v990, 0.0
    %v1007 = vmax.f32 %v991, 0.0
    %v1008 = vmax.f32 %v992, 0.0
    %v1009 = vmax.f32 %v993, 0.0
    %v1010 = vmax.f32 %v994, 0.0
    %v1011 = vmax.f32 %v995, 0.0
    %v1012 = vmax.f32 %v996, 0.0
    %v1013 = vmax.f32 %v997, 0.0
    %v1014 = vmax.f32 %v998, 0.0
    %v1015 = vmax.f32 %v999, 0.0
    %v1016 = vmax.f32 %v1000, 0.0
    %v1017 = vmax.f32 %v1001, 0.0
    %v1018 = vmax.f32 %v1002, 0.0
    %v1019 = vmax.f32 %v1003, 0.0
    %v1020 = vlaneseq
    %v1021 = vshrl.u32 %v1020, 7
    %v1022 = vadd.s32 %v1021, 8
    %v1023 = vld [vmem:[%s3] sm:$0x1]
    %v1024 = vperm.slane %v1023, 0
    %vm1025 = vcmp.lt.s32.totalorder %v1021, %v1024
    %vm1026 = vcmp.lt.s32.totalorder %v1022, %v1024
    %v1027 = vsel %vm1025, 1, 0
    %v1028 = vsel %vm1026, 1, 0
    %vm1029 = vcmp.eq.s32.totalorder %v1027, 1
    %vm1030 = vcmp.eq.s32.totalorder %v1028, 1
    %v1031 = vsel %vm1029, %v1004, 0.0
    %v1032 = vsel %vm1030, %v1005, 0.0
    %v1033 = vsel %vm1029, %v1006, 0.0
    %v1034 = vsel %vm1030, %v1007, 0.0
    %v1035 = vsel %vm1029, %v1008, 0.0
    %v1036 = vsel %vm1030, %v1009, 0.0
    %v1037 = vsel %vm1029, %v1010, 0.0
    %v1038 = vsel %vm1030, %v1011, 0.0
    %v1039 = vsel %vm1029, %v1012, 0.0
    %v1040 = vsel %vm1030, %v1013, 0.0
    %v1041 = vsel %vm1029, %v1014, 0.0
    %v1042 = vsel %vm1030, %v1015, 0.0
    %v1043 = vsel %vm1029, %v1016, 0.0
    %v1044 = vsel %vm1030, %v1017, 0.0
    %v1045 = vsel %vm1029, %v1018, 0.0
    %v1046 = vsel %vm1030, %v1019, 0.0
    %v1047 = vmax.f32 %v1031, %v1032
    %v1048 = vrot.slane %v1047, 4
    %v1049 = vmax.f32 %v1047, %v1048
    %v1050 = vrot.slane %v1049, 2
    %v1051 = vmax.f32 %v1049, %v1050
    %v1052 = vrot.slane %v1051, 1
    %v1053 = vmax.f32 %v1051, %v1052
    %v1054 = vmax.f32 %v1033, %v1034
    %v1055 = vrot.slane %v1054, 4
    %v1056 = vmax.f32 %v1054, %v1055
    %v1057 = vrot.slane %v1056, 2
    %v1058 = vmax.f32 %v1056, %v1057
    %v1059 = vrot.slane %v1058, 1
    %v1060 = vmax.f32 %v1058, %v1059
    %v1061 = vmax.f32 %v1035, %v1036
    %v1062 = vrot.slane %v1061, 4
    %v1063 = vmax.f32 %v1061, %v1062
    %v1064 = vrot.slane %v1063, 2
    %v1065 = vmax.f32 %v1063, %v1064
    %v1066 = vrot.slane %v1065, 1
    %v1067 = vmax.f32 %v1065, %v1066
    %v1068 = vmax.f32 %v1037, %v1038
    %v1069 = vrot.slane %v1068, 4
    %v1070 = vmax.f32 %v1068, %v1069
    %v1071 = vrot.slane %v1070, 2
    %v1072 = vmax.f32 %v1070, %v1071
    %v1073 = vrot.slane %v1072, 1
    %v1074 = vmax.f32 %v1072, %v1073
    %v1075 = vmax.f32 %v1039, %v1040
    %v1076 = vrot.slane %v1075, 4
    %v1077 = vmax.f32 %v1075, %v1076
    %v1078 = vrot.slane %v1077, 2
    %v1079 = vmax.f32 %v1077, %v1078
    %v1080 = vrot.slane %v1079, 1
    %v1081 = vmax.f32 %v1079, %v1080
    %v1082 = vmax.f32 %v1041, %v1042
    %v1083 = vrot.slane %v1082, 4
    %v1084 = vmax.f32 %v1082, %v1083
    %v1085 = vrot.slane %v1084, 2
    %v1086 = vmax.f32 %v1084, %v1085
    %v1087 = vrot.slane %v1086, 1
    %v1088 = vmax.f32 %v1086, %v1087
    %v1089 = vmax.f32 %v1043, %v1044
    %v1090 = vrot.slane %v1089, 4
    %v1091 = vmax.f32 %v1089, %v1090
    %v1092 = vrot.slane %v1091, 2
    %v1093 = vmax.f32 %v1091, %v1092
    %v1094 = vrot.slane %v1093, 1
    %v1095 = vmax.f32 %v1093, %v1094
    %v1096 = vmax.f32 %v1045, %v1046
    %v1097 = vrot.slane %v1096, 4
    %v1098 = vmax.f32 %v1096, %v1097
    %v1099 = vrot.slane %v1098, 2
    %v1100 = vmax.f32 %v1098, %v1099
    %v1101 = vrot.slane %v1100, 1
    %v1102 = vmax.f32 %v1100, %v1101
    %v1103 = vld [vmem:[#allocation7] sm:$0xff]
    %v1104 = vld [vmem:[#allocation7 + $0x8] sm:$0xff]
    %v1105 = vld [vmem:[#allocation7 + $0x10] sm:$0xff]
    %v1106 = vld [vmem:[#allocation7 + $0x18] sm:$0xff]
    %v1107 = vld [vmem:[#allocation7 + $0x20] sm:$0xff]
    %v1108 = vld [vmem:[#allocation7 + $0x28] sm:$0xff]
    %v1109 = vld [vmem:[#allocation7 + $0x30] sm:$0xff]
    %v1110 = vld [vmem:[#allocation7 + $0x38] sm:$0xff]
    %v1111 = vld [vmem:[#allocation7 + $0x40] sm:$0xff]
    %v1112 = vld [vmem:[#allocation7 + $0x48] sm:$0xff]
    %v1113 = vld [vmem:[#allocation7 + $0x50] sm:$0xff]
    %v1114 = vld [vmem:[#allocation7 + $0x58] sm:$0xff]
    %v1115 = vld [vmem:[#allocation7 + $0x60] sm:$0xff]
    %v1116 = vld [vmem:[#allocation7 + $0x68] sm:$0xff]
    %v1117 = vld [vmem:[#allocation7 + $0x70] sm:$0xff]
    %v1118 = vld [vmem:[#allocation7 + $0x78] sm:$0xff]
    %v1119 = vld [vmem:[%s5] sm:$0x1]
    %v1121 = vperm.slane %v1119, 0
    %vm1131 = vcmask 1041409
    %v1132 = vsel %vm1131, %v1060, %v1053
    %vm1133 = vcmask 1042434
    %v1134 = vsel %vm1133, %v1067, %v1132
    %vm1135 = vcmask 1043459
    %v1136 = vsel %vm1135, %v1074, %v1134
    %vm1137 = vcmask 1044484
    %v1138 = vsel %vm1137, %v1081, %v1136
    %vm1139 = vcmask 1045509
    %v1140 = vsel %vm1139, %v1088, %v1138
    %vm1141 = vcmask 1046534
    %v1142 = vsel %vm1141, %v1095, %v1140
    %vm1143 = vcmask 1047559
    %v1144 = vsel %vm1143, %v1102, %v1142
    %1146 = vmatpush.msra.mxu0 %v1118
    %1147 = vmatpush.msra.mxu0 %v1117
    %1148 = vmatpush.msra.mxu0 %v1116
    %1149 = vmatpush.msra.mxu0 %v1115
    %1150 = vmatpush.msra.mxu0 %v1114
    %1151 = vmatpush.msra.mxu0 %v1113
    %1152 = vmatpush.msra.mxu0 %v1112
    %1153 = vmatpush.msra.mxu0 %v1111
    %1154 = vmatpush.msra.mxu0 %v1110
    %1155 = vmatpush.msra.mxu0 %v1109
    %1156 = vmatpush.msra.mxu0 %v1108
    %1157 = vmatpush.msra.mxu0 %v1107
    %1158 = vmatpush.msra.mxu0 %v1106
    %1159 = vmatpush.msra.mxu0 %v1105
    %1160 = vmatpush.msra.mxu0 %v1104
    %1161 = vmatpush.msra.mxu0 %v1103
    %1162 = vmatmul.f32.gmra.mxu0 %v1144
    %v1163 = vpop.f32.mrf.mxu0
    %v1164 = vadd.f32 %v1121, %v1163
    %1165 = vdwg.mxu0
    %v1166 = vxor.u32 %v1164, 2147483648
    %v1167 = vmul.f32 %v1166, 1.442695
    %v1168 = vpow.pop %v1167
    %v1169 = vadd.f32 %v1168, 1.0
    %v1170 = vrcp.pop %v1169
    %v1171 = vmul.f32 %v1169, %v1170
    %v1172 = vsub.f32 1.0, %v1171
    %v1173 = vmul.f32 %v1170, %v1172
    %v1174 = vadd.f32 %v1170, %v1173
    %vm1175 = vweird.f32 %v1169
    %vm1176 = vweird.f32 %v1170
    %vm1177 = vmor %vm1175, %vm1176
    %v1178 = vsel %vm1177, %v1170, %v1174
    %v1179 = vand.u32 2147483647, %v1169
    %vm1180 = vcmp.eq.f32.partialorder %v1179, 8.507059e+37
    %v1181 = vand.u32 %v1169, 2147483648
    %v1182 = vor.u32 1.1754944e-38, %v1181
    %v1183 = vsel %vm1180, %v1182, %v1178
    %v1184 = vmul.f32 1.0, %v1183
    %1185 = vst [vmem:[#allocation8] sm:$0xff] %v1184
    // Predicated region
    $region38: #{tpu_custom_call.1} parent=1 // pred_check
      _
    $region39: #{tpu_custom_call.1} parent=1 // pred_check_branch
      %1187 = sbr.rel (0) target = $region41
    $region40: #{tpu_custom_call.1} parent=1 // pred_region
      %1189 = vsyncadd [#allocation4], 0
      %s1191 = sshll.u32 [#allocation8], 4
      %s1192 = int_to_ptr.vmem [resolvable:$true] %s1191
      %s1193 = sshll.u32 %s6, 4
      %s1194 = int_to_ptr.hbm [resolvable:$true] %s1193
      %1196 = dma.vmem_to_hbm [thread:$0]  %s1192, 128, %s1194, [#allocation4]
    $region41: #{tpu_custom_call.1} parent=1 // pred_fallthru
      _
    // Predicated region
    $region42: #{tpu_custom_call.1} parent=1 // pred_check
      _
    $region43: #{tpu_custom_call.1} parent=1 // pred_check_branch
      %1198 = sbr.rel (0) target = $region45
    $region44: #{tpu_custom_call.1} parent=1 // pred_region
      %1200 = dma.done [#allocation4], 128
    $region45: #{tpu_custom_call.1} parent=1 // pred_fallthru
      _
    %1201 = vsyncpa [#allocation3], 1
    %1202 = vsyncpa [#allocation6], 1
    %1203 = vsyncpa [#allocation4], 1

</llo_original>
